<compile_context>
chip_gen: v5e
topology: v5e:2x2
jax: 0.10.0
libtpu: 0.0.40
codegen_flags: <defaults>
</compile_context>

<pallas_src>
import jax
import jax.numpy as jnp
from jax.experimental import pallas as pl
from jax.experimental.pallas import tpu as pltpu

LANE = 128     # vreg lane width
SUBLANE = 8    # vreg sublane count (f32)


def _linear_relu_kernel(x_ref, w_ref, b_ref, o_ref):
    # x_ref: (Bp, 128)  w_ref: (128, 128)  b_ref: (1, 128)  o_ref: (Bp, 128)
    y = jnp.dot(x_ref[...], w_ref[...], preferred_element_type=jnp.float32)
    y = y + b_ref[...]
    o_ref[...] = jnp.maximum(y, 0.0).astype(o_ref.dtype)


def _round_up(n, m):
    return ((n + m - 1) // m) * m


def toy_model_forward(x, w_t, b):
    """y = relu(x @ w_t + b), compute inside a single gridless Pallas kernel.

    x:   (B, IN)   float32
    w_t: (IN, OUT) float32   (PyTorch weight transposed)
    b:   (OUT,)    float32
    """
    B, IN = x.shape
    OUT = w_t.shape[1]

    # Lane/sublane-aligned zero padding -> unmasked vector loads/stores and an
    # aligned MXU contraction. Zero padding keeps the math exact.
    Bp = _round_up(B, SUBLANE)
    INp = _round_up(IN, LANE)
    OUTp = _round_up(OUT, LANE)

    x_p = jnp.zeros((Bp, INp), x.dtype).at[:B, :IN].set(x)
    w_p = jnp.zeros((INp, OUTp), w_t.dtype).at[:IN, :OUT].set(w_t)
    b_p = jnp.zeros((1, OUTp), b.dtype).at[0, :OUT].set(b)

    out_p = pl.pallas_call(
        _linear_relu_kernel,
        out_shape=jax.ShapeDtypeStruct((Bp, OUTp), x.dtype),
        # Whole-array operands resident in VMEM; no grid, no pipelining
        # machinery for a problem this small.
        in_specs=[
            pl.BlockSpec(memory_space=pltpu.MemorySpace.VMEM),
            pl.BlockSpec(memory_space=pltpu.MemorySpace.VMEM),
            pl.BlockSpec(memory_space=pltpu.MemorySpace.VMEM),
        ],
        out_specs=pl.BlockSpec(memory_space=pltpu.MemorySpace.VMEM),
    )(x_p, w_p, b_p)

    # TODO(synk): if batch ever scales to thousands of rows, add a "parallel"
    # batch grid axis with lane-dense (e.g. 512, 128) tiles and keep the
    # weight/bias blocks resident at (0, 0); sized against 64 MiB VMEM on v7x.
    return out_p[:B, :OUT]


if __name__ == "__main__":
    key = jax.random.PRNGKey(0)
    k_x, k_w, k_b = jax.random.split(key, 3)

    IN_FEATURES = 10
    OUT_FEATURES = 10
    BATCH = 8

    # Deterministic parameter init mimicking torch.nn.Linear's default
    # uniform(-1/sqrt(fan_in), 1/sqrt(fan_in)) initialization.
    bound = 1.0 / jnp.sqrt(jnp.float32(IN_FEATURES))
    weight = jax.random.uniform(
        k_w, (OUT_FEATURES, IN_FEATURES), jnp.float32, -bound, bound
    )  # PyTorch layout: (out, in)
    bias = jax.random.uniform(
        k_b, (OUT_FEATURES,), jnp.float32, -bound, bound
    )

    x = jax.random.normal(k_x, (BATCH, IN_FEATURES), jnp.float32)

    # Kernel takes the transposed weight (in, out).
    w_t = weight.T

    fwd = jax.jit(toy_model_forward)
    out = fwd(x, w_t, bias)
    out = jax.block_until_ready(out)

    # Reference check against plain JAX implementation of the same math.
    ref = jnp.maximum(x @ weight.T + bias, 0.0)
    assert out.shape == (BATCH, OUT_FEATURES)
    assert jnp.allclose(out, ref, atol=1e-5, rtol=1e-5)

    print("KERNEL_OK")
</pallas_src>

<mosaic_0001>
module attributes {stable_mosaic.version = 11 : i64} {
  func.func @_linear_relu_kernel(%arg0: memref<8x128xf32, #tpu.memory_space<vmem>>, %arg1: memref<128x128xf32, #tpu.memory_space<vmem>>, %arg2: memref<1x128xf32, #tpu.memory_space<vmem>>, %arg3: memref<8x128xf32, #tpu.memory_space<vmem>>) attributes {dimension_semantics = [], scalar_prefetch = 0 : i64, scratch_operands = 0 : i64, tpu.core_type = #tpu.core_type<tc>} {
    %c0 = arith.constant 0 : index
    %c0_0 = arith.constant 0 : index
    %0 = vector.load %arg0[%c0, %c0_0] : memref<8x128xf32, #tpu.memory_space<vmem>>, vector<8x128xf32>
    %c0_1 = arith.constant 0 : index
    %c0_2 = arith.constant 0 : index
    %1 = vector.load %arg1[%c0_1, %c0_2] : memref<128x128xf32, #tpu.memory_space<vmem>>, vector<128x128xf32>
    %cst = arith.constant dense<0.000000e+00> : vector<8x128xf32>
    %2 = tpu.matmul %0, %1, %cst {dimension_numbers = #tpu.dot_dimension_numbers<[1], [0], [0], [1], [0, 0, 1, 1], [], []>} : vector<8x128xf32>, vector<128x128xf32>, vector<8x128xf32> -> vector<8x128xf32>
    %c0_3 = arith.constant 0 : index
    %c0_4 = arith.constant 0 : index
    %3 = vector.load %arg2[%c0_3, %c0_4] : memref<1x128xf32, #tpu.memory_space<vmem>>, vector<1x128xf32>
    %4 = vector.broadcast %3 : vector<1x128xf32> to vector<8x128xf32>
    %5 = arith.addf %2, %4 : vector<8x128xf32>
    %cst_5 = arith.constant 0.000000e+00 : f32
    %6 = vector.broadcast %cst_5 : f32 to vector<8x128xf32>
    %7 = arith.maximumf %5, %6 : vector<8x128xf32>
    %c0_6 = arith.constant 0 : index
    %c0_7 = arith.constant 0 : index
    %8 = vector.load %arg3[%c0_6, %c0_7] : memref<8x128xf32, #tpu.memory_space<vmem>>, vector<8x128xf32>
    tpu.vector_store %arg3[%c0_6, %c0_7], %7 {strides = array<i32>} : memref<8x128xf32, #tpu.memory_space<vmem>>, vector<8x128xf32>,
    return
  }
}

</mosaic_0001>

<llo_original>
// kernel: toy_model_forward.1
$region0: #{toy_model_forward.1}
  #allocation0 [shape = 'u32[]', space=smem, size = 0x4, offset = 0x4, fixed_abs, tag = 'smem constant byte address 0x4 - core index']
  #allocation1 [shape = 'u32[72,128]{1,0:T(1,128)}', space=vmem, size = 0x9000, scoped, tag = 'internal scratch']
  %s0 = inlined_call_operand.vmem [shape: f32[8,128], index: 0, kind: input, shape index: {}]
  %s1 = inlined_call_operand.vmem [shape: f32[128,128], index: 1, kind: input, shape index: {}]
  %s2 = inlined_call_operand.vmem [shape: f32[1,128], index: 2, kind: input, shape index: {}]
  %s3 = inlined_call_operand.hbm [shape: f32[8,128], index: 3, kind: output, shape index: {}]
  %s4 = sld [smem:[#allocation0]]
  $region22: #{toy_model_forward.1} parent=0
    _
  %s6 = ssub.s32 1, %s4
  %s7 = scalar_select 0, %s6, %s4
  $region1: #{toy_model_forward.1} parent=0
    #allocation2 [shape = 'u8[4096]{0}', space=vmem, size = 0x1000, scoped, tag = 'output window, operand 0, single buffered']
    #allocation3 [shape = 's32[1]{0}', space=sflag, size = 0x4, scoped, tag = 'scoped memory for toy_model_forward.1']
    %8 = vsyncpa [#allocation3], 0
    // Predicated region
    $region2: #{toy_model_forward.1} parent=1 // pred_check
      _
    $region3: #{toy_model_forward.1} parent=1 // pred_check_branch
      %10 = sbr.rel (0) target = $region5
    $region4: #{toy_model_forward.1} parent=1 // pred_region
      _
    $region5: #{toy_model_forward.1} parent=1 // pred_fallthru
      _
    // Predicated region
    $region6: #{toy_model_forward.1} parent=1 // pred_check
      _
    $region7: #{toy_model_forward.1} parent=1 // pred_check_branch
      %12 = sbr.rel (0) target = $region9
    $region8: #{toy_model_forward.1} parent=1 // pred_region
      _
    $region9: #{toy_model_forward.1} parent=1 // pred_fallthru
      _
    // Predicated region
    $region10: #{toy_model_forward.1} parent=1 // pred_check
      _
    $region11: #{toy_model_forward.1} parent=1 // pred_check_branch
      %14 = sbr.rel (0) target = $region13
    $region12: #{toy_model_forward.1} parent=1 // pred_region
      _
    $region13: #{toy_model_forward.1} parent=1 // pred_fallthru
      _
    %v15 = vld [vmem:[%s0] sm:$0xff]
    %v16 = vld [vmem:[%s1] sm:$0xff]
    %v17 = vld [vmem:[%s1 + $0x8] sm:$0xff]
    %v18 = vld [vmem:[%s1 + $0x10] sm:$0xff]
    %v19 = vld [vmem:[%s1 + $0x18] sm:$0xff]
    %v20 = vld [vmem:[%s1 + $0x20] sm:$0xff]
    %v21 = vld [vmem:[%s1 + $0x28] sm:$0xff]
    %v22 = vld [vmem:[%s1 + $0x30] sm:$0xff]
    %v23 = vld [vmem:[%s1 + $0x38] sm:$0xff]
    %v24 = vld [vmem:[%s1 + $0x40] sm:$0xff]
    %v25 = vld [vmem:[%s1 + $0x48] sm:$0xff]
    %v26 = vld [vmem:[%s1 + $0x50] sm:$0xff]
    %v27 = vld [vmem:[%s1 + $0x58] sm:$0xff]
    %v28 = vld [vmem:[%s1 + $0x60] sm:$0xff]
    %v29 = vld [vmem:[%s1 + $0x68] sm:$0xff]
    %v30 = vld [vmem:[%s1 + $0x70] sm:$0xff]
    %v31 = vld [vmem:[%s1 + $0x78] sm:$0xff]
    %v32 = vld [vmem:[%s2] sm:$0x1]
    %v34 = vperm.slane %v32, 0
    %36 = vmatpush.msra.mxu0 %v31
    %37 = vmatpush.msra.mxu0 %v30
    %38 = vmatpush.msra.mxu0 %v29
    %39 = vmatpush.msra.mxu0 %v28
    %40 = vmatpush.msra.mxu0 %v27
    %41 = vmatpush.msra.mxu0 %v26
    %42 = vmatpush.msra.mxu0 %v25
    %43 = vmatpush.msra.mxu0 %v24
    %44 = vmatpush.msra.mxu0 %v23
    %45 = vmatpush.msra.mxu0 %v22
    %46 = vmatpush.msra.mxu0 %v21
    %47 = vmatpush.msra.mxu0 %v20
    %48 = vmatpush.msra.mxu0 %v19
    %49 = vmatpush.msra.mxu0 %v18
    %50 = vmatpush.msra.mxu0 %v17
    %51 = vmatpush.msra.mxu0 %v16
    %52 = vmatmul.f32.gmra.mxu0 %v15
    %v53 = vpop.f32.mrf.mxu0
    %v54 = vadd.f32 %v34, %v53
    %55 = vdwg.mxu0
    %v56 = vmax.f32 %v54, 0.0
    %57 = vst [vmem:[#allocation2] sm:$0xff] %v56
    // Predicated region
    $region14: #{toy_model_forward.1} parent=1 // pred_check
      _
    $region15: #{toy_model_forward.1} parent=1 // pred_check_branch
      %59 = sbr.rel (0) target = $region17
    $region16: #{toy_model_forward.1} parent=1 // pred_region
      %61 = vsyncadd [#allocation3], 0
      %s63 = sshll.u32 [#allocation2], 4
      %s64 = int_to_ptr.vmem [resolvable:$true] %s63
      %s65 = sshll.u32 %s3, 4
      %s66 = int_to_ptr.hbm [resolvable:$true] %s65
      %68 = dma.vmem_to_hbm [thread:$0]  %s64, 128, %s66, [#allocation3]
    $region17: #{toy_model_forward.1} parent=1 // pred_fallthru
      _
    // Predicated region
    $region18: #{toy_model_forward.1} parent=1 // pred_check
      _
    $region19: #{toy_model_forward.1} parent=1 // pred_check_branch
      %70 = sbr.rel (0) target = $region21
    $region20: #{toy_model_forward.1} parent=1 // pred_region
      %72 = dma.done [#allocation3], 128
    $region21: #{toy_model_forward.1} parent=1 // pred_fallthru
      _
    %73 = vsyncpa [#allocation3], 1

</llo_original>
